<compile_context>
chip_gen: v7x
topology: tpu7x:2x2x1
jax: 0.10.0
libtpu: 0.0.40
codegen_flags: <defaults>
</compile_context>

<pallas_src>
import jax
import jax.numpy as jnp
from jax.experimental import pallas as pl
from jax.experimental.pallas import tpu as pltpu

M_VOCAB = 64       # `m` (vocab size) in the reference module
EMB_DIM = 200      # embedding dimension from nn.Embedding(m, 200)
TOK_BLOCK = 256    # tokens processed per grid step
LANE = 128         # TPU lane width


def _embedding_kernel(idx_ref, emb_ref, out_ref):
    """One-hot MXU gather of TOK_BLOCK embedding rows per grid step.

    idx_ref : VMEM int32[TOK_BLOCK, 1]        (token ids for this tile)
    emb_ref : VMEM f32[VOCAB, EMB_PAD]        (full table, resident each step)
    out_ref : VMEM f32[TOK_BLOCK, EMB_PAD]
    """
    tok_block = out_ref.shape[0]
    vocab = emb_ref.shape[0]

    ids = idx_ref[...]                                              # (T, 1)
    iota = jax.lax.broadcasted_iota(jnp.int32, (tok_block, vocab), 1)
    one_hot = (iota == ids).astype(jnp.float32)                     # (T, V)

    # Exact gather: each output row sums one 1.0*row plus exact zeros (f32
    # accumulate on the MXU), so this is bit-identical to a row gather.
    out_ref[...] = jnp.dot(
        one_hot, emb_ref[...], preferred_element_type=jnp.float32
    ).astype(out_ref.dtype)


def gnn_forward(x_idx, emb_table):
    """Embedding lookup: x_idx int (B, S) -> f32 (B, S, EMB_DIM)."""
    B, S = x_idx.shape
    V, D = emb_table.shape
    N = B * S
    flat_idx = x_idx.reshape(N).astype(jnp.int32)

    # Tiny batches: custom-call launch + pipeline setup dominates -> plain XLA.
    if N < TOK_BLOCK:
        return jnp.take(emb_table, flat_idx, axis=0).reshape(B, S, D)

    # Lane-dense padding of the embedding dim (200 -> 256).
    d_pad = ((D + LANE - 1) // LANE) * LANE
    emb_padded = jnp.pad(emb_table, ((0, 0), (0, d_pad - D)))

    # Pad the token axis up to a TOK_BLOCK multiple (extra rows discarded).
    n_pad = ((N + TOK_BLOCK - 1) // TOK_BLOCK) * TOK_BLOCK
    idx_padded = jnp.pad(flat_idx, (0, n_pad - N)).reshape(n_pad, 1)

    out_padded = pl.pallas_call(
        _embedding_kernel,
        out_shape=jax.ShapeDtypeStruct((n_pad, d_pad), emb_table.dtype),
        grid_spec=pltpu.PrefetchScalarGridSpec(
            num_scalar_prefetch=0,
            grid=(n_pad // TOK_BLOCK,),
            in_specs=[
                # Per-tile token ids.
                pl.BlockSpec((TOK_BLOCK, 1), lambda i: (i, 0)),
                # Full embedding table, constant block index -> stays resident.
                pl.BlockSpec((V, d_pad), lambda i: (0, 0)),
            ],
            out_specs=pl.BlockSpec((TOK_BLOCK, d_pad), lambda i: (i, 0)),
        ),
        compiler_params=pltpu.CompilerParams(
            dimension_semantics=("parallel",),
        ),
    )(idx_padded, emb_padded)

    return out_padded[:N, :D].reshape(B, S, D)


if __name__ == "__main__":
    key = jax.random.PRNGKey(0)
    k_emb, k_idx1, k_idx2, k_idx3 = jax.random.split(key, 4)

    # Deterministic parameter init (nn.Embedding default: N(0, 1)).
    emb_table = jax.random.normal(k_emb, (M_VOCAB, EMB_DIM), dtype=jnp.float32)

    # Case 1: exactly one TOK_BLOCK tile (kernel path).
    B1, S1 = 2, 128
    x1 = jax.random.randint(k_idx1, (B1, S1), 0, M_VOCAB, dtype=jnp.int32)
    out1 = jax.block_until_ready(gnn_forward(x1, emb_table))
    ref1 = emb_table[x1]
    assert out1.shape == (B1, S1, EMB_DIM)
    assert jnp.allclose(out1, ref1), "mismatch vs reference gather (case 1)"

    # Case 2: non-multiple token count -> exercises padding (2 grid steps).
    B2, S2 = 3, 100
    x2 = jax.random.randint(k_idx2, (B2, S2), 0, M_VOCAB, dtype=jnp.int32)
    out2 = jax.block_until_ready(gnn_forward(x2, emb_table))
    ref2 = emb_table[x2]
    assert out2.shape == (B2, S2, EMB_DIM)
    assert jnp.allclose(out2, ref2), "mismatch vs reference gather (case 2)"

    # Case 3: tiny input -> XLA fallback path.
    B3, S3 = 2, 8
    x3 = jax.random.randint(k_idx3, (B3, S3), 0, M_VOCAB, dtype=jnp.int32)
    out3 = jax.block_until_ready(gnn_forward(x3, emb_table))
    ref3 = emb_table[x3]
    assert out3.shape == (B3, S3, EMB_DIM)
    assert jnp.allclose(out3, ref3), "mismatch vs reference gather (case 3)"

    print("KERNEL_OK")
</pallas_src>

<mosaic_0001>
module attributes {stable_mosaic.version = 11 : i64} {
  func.func @_embedding_kernel(%arg0: i32, %arg1: memref<256x1xi32, #tpu.memory_space<vmem>>, %arg2: memref<64x256xf32, #tpu.memory_space<vmem>>, %arg3: memref<256x256xf32, #tpu.memory_space<vmem>>) attributes {dimension_semantics = [#tpu.dimension_semantics<parallel>], iteration_bounds = array<i64: 1>, scalar_prefetch = 0 : i64, scratch_operands = 0 : i64, tpu.core_type = #tpu.core_type<tc>, window_params = [{transform_indices = @transform_0, window_bounds = array<i64: 256, 1>}, {pipeline_mode = #tpu.pipeline_mode<synchronous>, transform_indices = @transform_1, window_bounds = array<i64: 64, 256>}, {transform_indices = @transform_2, window_bounds = array<i64: 256, 256>}]} {
    %c0 = arith.constant 0 : index
    %c0_0 = arith.constant 0 : index
    %0 = vector.load %arg1[%c0, %c0_0] : memref<256x1xi32, #tpu.memory_space<vmem>>, vector<256x1xi32>
    %1 = tpu.iota {dimensions = array<i32: 1>} : vector<256x64xi32>
    %2 = vector.broadcast %0 : vector<256x1xi32> to vector<256x64xi32>
    %3 = arith.cmpi eq, %1, %2 : vector<256x64xi32>
    %4 = arith.extui %3 : vector<256x64xi1> to vector<256x64xi32>
    %5 = arith.sitofp %4 : vector<256x64xi32> to vector<256x64xf32>
    %c0_1 = arith.constant 0 : index
    %c0_2 = arith.constant 0 : index
    %6 = vector.load %arg2[%c0_1, %c0_2] : memref<64x256xf32, #tpu.memory_space<vmem>>, vector<64x256xf32>
    %cst = arith.constant dense<0.000000e+00> : vector<256x256xf32>
    %7 = tpu.matmul %5, %6, %cst {dimension_numbers = #tpu.dot_dimension_numbers<[1], [0], [0], [1], [0, 0, 1, 1], [], []>} : vector<256x64xf32>, vector<64x256xf32>, vector<256x256xf32> -> vector<256x256xf32>
    %c0_3 = arith.constant 0 : index
    %c0_4 = arith.constant 0 : index
    %8 = vector.load %arg3[%c0_3, %c0_4] : memref<256x256xf32, #tpu.memory_space<vmem>>, vector<256x256xf32>
    tpu.vector_store %arg3[%c0_3, %c0_4], %7 {strides = array<i32>} : memref<256x256xf32, #tpu.memory_space<vmem>>, vector<256x256xf32>,
    return
  }
  func.func @transform_0(%arg0: i32) -> (i32, i32) {
    %c0_i32 = arith.constant 0 : i32
    %c0_i32_0 = arith.constant 0 : i32
    return %arg0, %c0_i32 : i32, i32
  }
  func.func @transform_1(%arg0: i32) -> (i32, i32) {
    %c0_i32 = arith.constant 0 : i32
    %c0_i32_0 = arith.constant 0 : i32
    %c0_i32_1 = arith.constant 0 : i32
    return %c0_i32, %c0_i32_0 : i32, i32
  }
  func.func @transform_2(%arg0: i32) -> (i32, i32) {
    %c0_i32 = arith.constant 0 : i32
    %c0_i32_0 = arith.constant 0 : i32
    return %arg0, %c0_i32 : i32, i32
  }
}

</mosaic_0001>

<llo_original>
// kernel: tpu_custom_call.1
$region0: #{tpu_custom_call.1}
  #allocation0 [shape = 'u32[]', space=smem, size = 0x4, offset = 0x4, fixed_abs, tag = 'smem constant byte address 0x4 - core index']
  #allocation1 [shape = 'u32[144,128]{1,0:T(1,128)}', space=vmem, size = 0x12000, scoped, tag = 'internal scratch']
  %s0 = inlined_call_operand.vmem [shape: s32[256,1], index: 0, kind: input, shape index: {}]
  %s1 = inlined_call_operand.vmem [shape: f32[64,256], index: 1, kind: input, shape index: {}]
  %s2 = inlined_call_operand.hbm [shape: f32[256,256], index: 2, kind: output, shape index: {}]
  %s3 = sld [smem:[#allocation0]]
  $region18: #{tpu_custom_call.1} parent=0
    _
  %s5 = ssub.s32 1, %s3
  %s6 = scalar_select 0, %s5, %s3
  $region1: #{tpu_custom_call.1} parent=0
    #allocation2 [shape = 'u8[262144]{0}', space=vmem, size = 0x40000, scoped, tag = 'output window, operand 0, single buffered']
    #allocation3 [shape = 's32[1]{0}', space=sflag, size = 0x4, scoped, tag = 'scoped memory for tpu_custom_call.1']
    %7 = vsyncpa [#allocation3], 0
    // Predicated region
    $region2: #{tpu_custom_call.1} parent=1 // pred_check
      _
    $region3: #{tpu_custom_call.1} parent=1 // pred_check_branch
      %9 = sbr.rel (0) target = $region5
    $region4: #{tpu_custom_call.1} parent=1 // pred_region
      _
    $region5: #{tpu_custom_call.1} parent=1 // pred_fallthru
      _
    // Predicated region
    $region6: #{tpu_custom_call.1} parent=1 // pred_check
      _
    $region7: #{tpu_custom_call.1} parent=1 // pred_check_branch
      %11 = sbr.rel (0) target = $region9
    $region8: #{tpu_custom_call.1} parent=1 // pred_region
      _
    $region9: #{tpu_custom_call.1} parent=1 // pred_fallthru
      _
    %v12 = vld [vmem:[%s0] sm:$0xff]
    %v13 = vld [vmem:[%s0 + $0x8] sm:$0xff]
    %v14 = vld [vmem:[%s0 + $0x10] sm:$0xff]
    %v15 = vld [vmem:[%s0 + $0x18] sm:$0xff]
    %v16 = vld [vmem:[%s0 + $0x20] sm:$0xff]
    %v17 = vld [vmem:[%s0 + $0x28] sm:$0xff]
    %v18 = vld [vmem:[%s0 + $0x30] sm:$0xff]
    %v19 = vld [vmem:[%s0 + $0x38] sm:$0xff]
    %v20 = vld [vmem:[%s0 + $0x40] sm:$0xff]
    %v21 = vld [vmem:[%s0 + $0x48] sm:$0xff]
    %v22 = vld [vmem:[%s0 + $0x50] sm:$0xff]
    %v23 = vld [vmem:[%s0 + $0x58] sm:$0xff]
    %v24 = vld [vmem:[%s0 + $0x60] sm:$0xff]
    %v25 = vld [vmem:[%s0 + $0x68] sm:$0xff]
    %v26 = vld [vmem:[%s0 + $0x70] sm:$0xff]
    %v27 = vld [vmem:[%s0 + $0x78] sm:$0xff]
    %v28 = vld [vmem:[%s0 + $0x80] sm:$0xff]
    %v29 = vld [vmem:[%s0 + $0x88] sm:$0xff]
    %v30 = vld [vmem:[%s0 + $0x90] sm:$0xff]
    %v31 = vld [vmem:[%s0 + $0x98] sm:$0xff]
    %v32 = vld [vmem:[%s0 + $0xa0] sm:$0xff]
    %v33 = vld [vmem:[%s0 + $0xa8] sm:$0xff]
    %v34 = vld [vmem:[%s0 + $0xb0] sm:$0xff]
    %v35 = vld [vmem:[%s0 + $0xb8] sm:$0xff]
    %v36 = vld [vmem:[%s0 + $0xc0] sm:$0xff]
    %v37 = vld [vmem:[%s0 + $0xc8] sm:$0xff]
    %v38 = vld [vmem:[%s0 + $0xd0] sm:$0xff]
    %v39 = vld [vmem:[%s0 + $0xd8] sm:$0xff]
    %v40 = vld [vmem:[%s0 + $0xe0] sm:$0xff]
    %v41 = vld [vmem:[%s0 + $0xe8] sm:$0xff]
    %v42 = vld [vmem:[%s0 + $0xf0] sm:$0xff]
    %v43 = vld [vmem:[%s0 + $0xf8] sm:$0xff]
    %v44 = vlaneseq
    %v45 = vand.u32 %v44, 127
    %46 = vset.pattern.permute.xlu0 0
    %47 = vperm.xlu0 %46, %v12
    %v48 = vpop.permute.xlu0 %47
    %49 = vset.pattern.permute.xlu0 0
    %50 = vperm.xlu0 %49, %v13
    %v51 = vpop.permute.xlu0 %50
    %52 = vset.pattern.permute.xlu0 0
    %53 = vperm.xlu0 %52, %v14
    %v54 = vpop.permute.xlu0 %53
    %55 = vset.pattern.permute.xlu0 0
    %56 = vperm.xlu0 %55, %v15
    %v57 = vpop.permute.xlu0 %56
    %58 = vset.pattern.permute.xlu0 0
    %59 = vperm.xlu0 %58, %v16
    %v60 = vpop.permute.xlu0 %59
    %61 = vset.pattern.permute.xlu0 0
    %62 = vperm.xlu0 %61, %v17
    %v63 = vpop.permute.xlu0 %62
    %64 = vset.pattern.permute.xlu0 0
    %65 = vperm.xlu0 %64, %v18
    %v66 = vpop.permute.xlu0 %65
    %67 = vset.pattern.permute.xlu0 0
    %68 = vperm.xlu0 %67, %v19
    %v69 = vpop.permute.xlu0 %68
    %70 = vset.pattern.permute.xlu0 0
    %71 = vperm.xlu0 %70, %v20
    %v72 = vpop.permute.xlu0 %71
    %73 = vset.pattern.permute.xlu0 0
    %74 = vperm.xlu0 %73, %v21
    %v75 = vpop.permute.xlu0 %74
    %76 = vset.pattern.permute.xlu0 0
    %77 = vperm.xlu0 %76, %v22
    %v78 = vpop.permute.xlu0 %77
    %79 = vset.pattern.permute.xlu0 0
    %80 = vperm.xlu0 %79, %v23
    %v81 = vpop.permute.xlu0 %80
    %82 = vset.pattern.permute.xlu0 0
    %83 = vperm.xlu0 %82, %v24
    %v84 = vpop.permute.xlu0 %83
    %85 = vset.pattern.permute.xlu0 0
    %86 = vperm.xlu0 %85, %v25
    %v87 = vpop.permute.xlu0 %86
    %88 = vset.pattern.permute.xlu0 0
    %89 = vperm.xlu0 %88, %v26
    %v90 = vpop.permute.xlu0 %89
    %91 = vset.pattern.permute.xlu0 0
    %92 = vperm.xlu0 %91, %v27
    %v93 = vpop.permute.xlu0 %92
    %94 = vset.pattern.permute.xlu0 0
    %95 = vperm.xlu0 %94, %v28
    %v96 = vpop.permute.xlu0 %95
    %97 = vset.pattern.permute.xlu0 0
    %98 = vperm.xlu0 %97, %v29
    %v99 = vpop.permute.xlu0 %98
    %100 = vset.pattern.permute.xlu0 0
    %101 = vperm.xlu0 %100, %v30
    %v102 = vpop.permute.xlu0 %101
    %103 = vset.pattern.permute.xlu0 0
    %104 = vperm.xlu0 %103, %v31
    %v105 = vpop.permute.xlu0 %104
    %106 = vset.pattern.permute.xlu0 0
    %107 = vperm.xlu0 %106, %v32
    %v108 = vpop.permute.xlu0 %107
    %109 = vset.pattern.permute.xlu0 0
    %110 = vperm.xlu0 %109, %v33
    %v111 = vpop.permute.xlu0 %110
    %112 = vset.pattern.permute.xlu0 0
    %113 = vperm.xlu0 %112, %v34
    %v114 = vpop.permute.xlu0 %113
    %115 = vset.pattern.permute.xlu0 0
    %116 = vperm.xlu0 %115, %v35
    %v117 = vpop.permute.xlu0 %116
    %118 = vset.pattern.permute.xlu0 0
    %119 = vperm.xlu0 %118, %v36
    %v120 = vpop.permute.xlu0 %119
    %121 = vset.pattern.permute.xlu0 0
    %122 = vperm.xlu0 %121, %v37
    %v123 = vpop.permute.xlu0 %122
    %124 = vset.pattern.permute.xlu0 0
    %125 = vperm.xlu0 %124, %v38
    %v126 = vpop.permute.xlu0 %125
    %127 = vset.pattern.permute.xlu0 0
    %128 = vperm.xlu0 %127, %v39
    %v129 = vpop.permute.xlu0 %128
    %130 = vset.pattern.permute.xlu0 0
    %131 = vperm.xlu0 %130, %v40
    %v132 = vpop.permute.xlu0 %131
    %133 = vset.pattern.permute.xlu0 0
    %134 = vperm.xlu0 %133, %v41
    %v135 = vpop.permute.xlu0 %134
    %136 = vset.pattern.permute.xlu0 0
    %137 = vperm.xlu0 %136, %v42
    %v138 = vpop.permute.xlu0 %137
    %139 = vset.pattern.permute.xlu0 0
    %140 = vperm.xlu0 %139, %v43
    %v141 = vpop.permute.xlu0 %140
    %vm142 = vcmp.eq.s32.totalorder %v45, %v48
    %vm143 = vcmp.eq.s32.totalorder %v45, %v51
    %vm144 = vcmp.eq.s32.totalorder %v45, %v54
    %vm145 = vcmp.eq.s32.totalorder %v45, %v57
    %vm146 = vcmp.eq.s32.totalorder %v45, %v60
    %vm147 = vcmp.eq.s32.totalorder %v45, %v63
    %vm148 = vcmp.eq.s32.totalorder %v45, %v66
    %vm149 = vcmp.eq.s32.totalorder %v45, %v69
    %vm150 = vcmp.eq.s32.totalorder %v45, %v72
    %vm151 = vcmp.eq.s32.totalorder %v45, %v75
    %vm152 = vcmp.eq.s32.totalorder %v45, %v78
    %vm153 = vcmp.eq.s32.totalorder %v45, %v81
    %vm154 = vcmp.eq.s32.totalorder %v45, %v84
    %vm155 = vcmp.eq.s32.totalorder %v45, %v87
    %vm156 = vcmp.eq.s32.totalorder %v45, %v90
    %vm157 = vcmp.eq.s32.totalorder %v45, %v93
    %vm158 = vcmp.eq.s32.totalorder %v45, %v96
    %vm159 = vcmp.eq.s32.totalorder %v45, %v99
    %vm160 = vcmp.eq.s32.totalorder %v45, %v102
    %vm161 = vcmp.eq.s32.totalorder %v45, %v105
    %vm162 = vcmp.eq.s32.totalorder %v45, %v108
    %vm163 = vcmp.eq.s32.totalorder %v45, %v111
    %vm164 = vcmp.eq.s32.totalorder %v45, %v114
    %vm165 = vcmp.eq.s32.totalorder %v45, %v117
    %vm166 = vcmp.eq.s32.totalorder %v45, %v120
    %vm167 = vcmp.eq.s32.totalorder %v45, %v123
    %vm168 = vcmp.eq.s32.totalorder %v45, %v126
    %vm169 = vcmp.eq.s32.totalorder %v45, %v129
    %vm170 = vcmp.eq.s32.totalorder %v45, %v132
    %vm171 = vcmp.eq.s32.totalorder %v45, %v135
    %vm172 = vcmp.eq.s32.totalorder %v45, %v138
    %vm173 = vcmp.eq.s32.totalorder %v45, %v141
    %v174 = vsel %vm142, 1, 0
    %v175 = vsel %vm143, 1, 0
    %v176 = vsel %vm144, 1, 0
    %v177 = vsel %vm145, 1, 0
    %v178 = vsel %vm146, 1, 0
    %v179 = vsel %vm147, 1, 0
    %v180 = vsel %vm148, 1, 0
    %v181 = vsel %vm149, 1, 0
    %v182 = vsel %vm150, 1, 0
    %v183 = vsel %vm151, 1, 0
    %v184 = vsel %vm152, 1, 0
    %v185 = vsel %vm153, 1, 0
    %v186 = vsel %vm154, 1, 0
    %v187 = vsel %vm155, 1, 0
    %v188 = vsel %vm156, 1, 0
    %v189 = vsel %vm157, 1, 0
    %v190 = vsel %vm158, 1, 0
    %v191 = vsel %vm159, 1, 0
    %v192 = vsel %vm160, 1, 0
    %v193 = vsel %vm161, 1, 0
    %v194 = vsel %vm162, 1, 0
    %v195 = vsel %vm163, 1, 0
    %v196 = vsel %vm164, 1, 0
    %v197 = vsel %vm165, 1, 0
    %v198 = vsel %vm166, 1, 0
    %v199 = vsel %vm167, 1, 0
    %v200 = vsel %vm168, 1, 0
    %v201 = vsel %vm169, 1, 0
    %v202 = vsel %vm170, 1, 0
    %v203 = vsel %vm171, 1, 0
    %v204 = vsel %vm172, 1, 0
    %v205 = vsel %vm173, 1, 0
    %v206 = vcvt.s32.f32 %v174
    %v207 = vcvt.s32.f32 %v175
    %v208 = vcvt.s32.f32 %v176
    %v209 = vcvt.s32.f32 %v177
    %v210 = vcvt.s32.f32 %v178
    %v211 = vcvt.s32.f32 %v179
    %v212 = vcvt.s32.f32 %v180
    %v213 = vcvt.s32.f32 %v181
    %v214 = vcvt.s32.f32 %v182
    %v215 = vcvt.s32.f32 %v183
    %v216 = vcvt.s32.f32 %v184
    %v217 = vcvt.s32.f32 %v185
    %v218 = vcvt.s32.f32 %v186
    %v219 = vcvt.s32.f32 %v187
    %v220 = vcvt.s32.f32 %v188
    %v221 = vcvt.s32.f32 %v189
    %v222 = vcvt.s32.f32 %v190
    %v223 = vcvt.s32.f32 %v191
    %v224 = vcvt.s32.f32 %v192
    %v225 = vcvt.s32.f32 %v193
    %v226 = vcvt.s32.f32 %v194
    %v227 = vcvt.s32.f32 %v195
    %v228 = vcvt.s32.f32 %v196
    %v229 = vcvt.s32.f32 %v197
    %v230 = vcvt.s32.f32 %v198
    %v231 = vcvt.s32.f32 %v199
    %v232 = vcvt.s32.f32 %v200
    %v233 = vcvt.s32.f32 %v201
    %v234 = vcvt.s32.f32 %v202
    %v235 = vcvt.s32.f32 %v203
    %v236 = vcvt.s32.f32 %v204
    %v237 = vcvt.s32.f32 %v205
    %v238 = vld [vmem:[%s1] sm:$0xff]
    %v239 = vld [vmem:[%s1 + $0x8] sm:$0xff]
    %v240 = vld [vmem:[%s1 + $0x10] sm:$0xff]
    %v241 = vld [vmem:[%s1 + $0x18] sm:$0xff]
    %v242 = vld [vmem:[%s1 + $0x20] sm:$0xff]
    %v243 = vld [vmem:[%s1 + $0x28] sm:$0xff]
    %v244 = vld [vmem:[%s1 + $0x30] sm:$0xff]
    %v245 = vld [vmem:[%s1 + $0x38] sm:$0xff]
    %v246 = vld [vmem:[%s1 + $0x40] sm:$0xff]
    %v247 = vld [vmem:[%s1 + $0x48] sm:$0xff]
    %v248 = vld [vmem:[%s1 + $0x50] sm:$0xff]
    %v249 = vld [vmem:[%s1 + $0x58] sm:$0xff]
    %v250 = vld [vmem:[%s1 + $0x60] sm:$0xff]
    %v251 = vld [vmem:[%s1 + $0x68] sm:$0xff]
    %v252 = vld [vmem:[%s1 + $0x70] sm:$0xff]
    %v253 = vld [vmem:[%s1 + $0x78] sm:$0xff]
    %vm254 = vcmask 523264
    %v256 = vsel %vm254, %v206, 0
    %v259 = vsel %vm254, %v207, 0
    %v262 = vsel %vm254, %v208, 0
    %v265 = vsel %vm254, %v209, 0
    %v268 = vsel %vm254, %v210, 0
    %v271 = vsel %vm254, %v211, 0
    %v274 = vsel %vm254, %v212, 0
    %v277 = vsel %vm254, %v213, 0
    %v280 = vsel %vm254, %v214, 0
    %v283 = vsel %vm254, %v215, 0
    %v286 = vsel %vm254, %v216, 0
    %v289 = vsel %vm254, %v217, 0
    %v292 = vsel %vm254, %v218, 0
    %v295 = vsel %vm254, %v219, 0
    %v298 = vsel %vm254, %v220, 0
    %v301 = vsel %vm254, %v221, 0
    %v304 = vsel %vm254, %v222, 0
    %v307 = vsel %vm254, %v223, 0
    %v310 = vsel %vm254, %v224, 0
    %v313 = vsel %vm254, %v225, 0
    %v316 = vsel %vm254, %v226, 0
    %v319 = vsel %vm254, %v227, 0
    %v322 = vsel %vm254, %v228, 0
    %v325 = vsel %vm254, %v229, 0
    %v328 = vsel %vm254, %v230, 0
    %v331 = vsel %vm254, %v231, 0
    %v334 = vsel %vm254, %v232, 0
    %v337 = vsel %vm254, %v233, 0
    %v340 = vsel %vm254, %v234, 0
    %v343 = vsel %vm254, %v235, 0
    %v346 = vsel %vm254, %v236, 0
    %v349 = vsel %vm254, %v237, 0
    %351 = vmatprep.subr.mxu0 %v239
    %352 = vmatpush1.msra.mxu0 %v238
    %353 = vmatprep.subr.mxu0 %v241
    %354 = vmatpush1.msra.mxu0 %v240
    %355 = vmatprep.subr.mxu0 %v243
    %356 = vmatpush1.msra.mxu0 %v242
    %357 = vmatprep.subr.mxu0 %v245
    %358 = vmatpush1.msra.mxu0 %v244
    %359 = vmatprep.subr.mxu0 %v247
    %360 = vmatpush1.msra.mxu0 %v246
    %361 = vmatprep.subr.mxu0 %v249
    %362 = vmatpush1.msra.mxu0 %v248
    %363 = vmatprep.subr.mxu0 %v251
    %364 = vmatpush1.msra.mxu0 %v250
    %365 = vmatprep.subr.mxu0 %v253
    %366 = vmatpush1.msra.mxu0 %v252
    %367 = vmatprep.subr.mxu0 0.0
    %368 = vmatpush1.msra.mxu0 0.0
    %369 = vmatprep.subr.mxu0 0.0
    %370 = vmatpush1.msra.mxu0 0.0
    %371 = vmatprep.subr.mxu0 0.0
    %372 = vmatpush1.msra.mxu0 0.0
    %373 = vmatprep.subr.mxu0 0.0
    %374 = vmatpush1.msra.mxu0 0.0
    %375 = vmatprep.subr.mxu0 0.0
    %376 = vmatpush1.msra.mxu0 0.0
    %377 = vmatprep.subr.mxu0 0.0
    %378 = vmatpush1.msra.mxu0 0.0
    %379 = vmatprep.subr.mxu0 0.0
    %380 = vmatpush1.msra.mxu0 0.0
    %381 = vmatprep.subr.mxu0 0.0
    %382 = vmatpush1.msra.mxu0 0.0
    %383 = vmatprep.subr.mxu0 0.0
    %384 = vmatpush1.msra.mxu0 0.0
    %385 = vmatprep.subr.mxu0 0.0
    %386 = vmatpush1.msra.mxu0 0.0
    %387 = vmatprep.subr.mxu0 0.0
    %388 = vmatpush1.msra.mxu0 0.0
    %389 = vmatprep.subr.mxu0 0.0
    %390 = vmatpush1.msra.mxu0 0.0
    %391 = vmatprep.subr.mxu0 0.0
    %392 = vmatpush1.msra.mxu0 0.0
    %393 = vmatprep.subr.mxu0 0.0
    %394 = vmatpush1.msra.mxu0 0.0
    %395 = vmatprep.subr.mxu0 0.0
    %396 = vmatpush1.msra.mxu0 0.0
    %397 = vmatprep.subr.mxu0 0.0
    %398 = vmatpush1.msra.mxu0 0.0
    %399 = vmatprep.subr.mxu0 0.0
    %400 = vmatpush1.msra.mxu0 0.0
    %401 = vmatprep.subr.mxu0 0.0
    %402 = vmatpush1.msra.mxu0 0.0
    %403 = vmatprep.subr.mxu0 0.0
    %404 = vmatpush1.msra.mxu0 0.0
    %405 = vmatprep.subr.mxu0 0.0
    %406 = vmatpush1.msra.mxu0 0.0
    %407 = vmatprep.subr.mxu0 0.0
    %408 = vmatpush1.msra.mxu0 0.0
    %409 = vmatprep.subr.mxu0 0.0
    %410 = vmatpush1.msra.mxu0 0.0
    %411 = vmatprep.subr.mxu0 0.0
    %412 = vmatpush1.msra.mxu0 0.0
    %413 = vmatprep.subr.mxu0 0.0
    %414 = vmatpush1.msra.mxu0 0.0
    %415 = vmatprep.mubr.f32.mxu0 0.0
    %416 = vmatmul.mubr.f32.gmra.mrb[0].mxu0 %v256
    %v417 = vpop.f32.mrb[0].mxu0
    %v418 = vadd.f32 0.0, %v417
    %v419 = vpop.f32.mrb[0].mxu0
    %v420 = vadd.f32 0.0, %v419
    %421 = vmatprep.mubr.f32.mxu0 0.0
    %422 = vmatmul.mubr.f32.gmra.mrb[0].mxu0 %v259
    %v423 = vpop.f32.mrb[0].mxu0
    %v424 = vadd.f32 0.0, %v423
    %v425 = vpop.f32.mrb[0].mxu0
    %v426 = vadd.f32 0.0, %v425
    %427 = vmatprep.mubr.f32.mxu0 0.0
    %428 = vmatmul.mubr.f32.gmra.mrb[0].mxu0 %v262
    %v429 = vpop.f32.mrb[0].mxu0
    %v430 = vadd.f32 0.0, %v429
    %v431 = vpop.f32.mrb[0].mxu0
    %v432 = vadd.f32 0.0, %v431
    %433 = vmatprep.mubr.f32.mxu0 0.0
    %434 = vmatmul.mubr.f32.gmra.mrb[0].mxu0 %v265
    %v435 = vpop.f32.mrb[0].mxu0
    %v436 = vadd.f32 0.0, %v435
    %v437 = vpop.f32.mrb[0].mxu0
    %v438 = vadd.f32 0.0, %v437
    %439 = vmatprep.mubr.f32.mxu0 0.0
    %440 = vmatmul.mubr.f32.gmra.mrb[0].mxu0 %v268
    %v441 = vpop.f32.mrb[0].mxu0
    %v442 = vadd.f32 0.0, %v441
    %v443 = vpop.f32.mrb[0].mxu0
    %v444 = vadd.f32 0.0, %v443
    %445 = vmatprep.mubr.f32.mxu0 0.0
    %446 = vmatmul.mubr.f32.gmra.mrb[0].mxu0 %v271
    %v447 = vpop.f32.mrb[0].mxu0
    %v448 = vadd.f32 0.0, %v447
    %v449 = vpop.f32.mrb[0].mxu0
    %v450 = vadd.f32 0.0, %v449
    %451 = vmatprep.mubr.f32.mxu0 0.0
    %452 = vmatmul.mubr.f32.gmra.mrb[0].mxu0 %v274
    %v453 = vpop.f32.mrb[0].mxu0
    %v454 = vadd.f32 0.0, %v453
    %v455 = vpop.f32.mrb[0].mxu0
    %v456 = vadd.f32 0.0, %v455
    %457 = vmatprep.mubr.f32.mxu0 0.0
    %458 = vmatmul.mubr.f32.gmra.mrb[0].mxu0 %v277
    %v459 = vpop.f32.mrb[0].mxu0
    %v460 = vadd.f32 0.0, %v459
    %v461 = vpop.f32.mrb[0].mxu0
    %v462 = vadd.f32 0.0, %v461
    %463 = vmatprep.mubr.f32.mxu0 0.0
    %464 = vmatmul.mubr.f32.gmra.mrb[0].mxu0 %v280
    %v465 = vpop.f32.mrb[0].mxu0
    %v466 = vadd.f32 0.0, %v465
    %v467 = vpop.f32.mrb[0].mxu0
    %v468 = vadd.f32 0.0, %v467
    %469 = vmatprep.mubr.f32.mxu0 0.0
    %470 = vmatmul.mubr.f32.gmra.mrb[0].mxu0 %v283
    %v471 = vpop.f32.mrb[0].mxu0
    %v472 = vadd.f32 0.0, %v471
    %v473 = vpop.f32.mrb[0].mxu0
    %v474 = vadd.f32 0.0, %v473
    %475 = vmatprep.mubr.f32.mxu0 0.0
    %476 = vmatmul.mubr.f32.gmra.mrb[0].mxu0 %v286
    %v477 = vpop.f32.mrb[0].mxu0
    %v478 = vadd.f32 0.0, %v477
    %v479 = vpop.f32.mrb[0].mxu0
    %v480 = vadd.f32 0.0, %v479
    %481 = vmatprep.mubr.f32.mxu0 0.0
    %482 = vmatmul.mubr.f32.gmra.mrb[0].mxu0 %v289
    %v483 = vpop.f32.mrb[0].mxu0
    %v484 = vadd.f32 0.0, %v483
    %v485 = vpop.f32.mrb[0].mxu0
    %v486 = vadd.f32 0.0, %v485
    %487 = vmatprep.mubr.f32.mxu0 0.0
    %488 = vmatmul.mubr.f32.gmra.mrb[0].mxu0 %v292
    %v489 = vpop.f32.mrb[0].mxu0
    %v490 = vadd.f32 0.0, %v489
    %v491 = vpop.f32.mrb[0].mxu0
    %v492 = vadd.f32 0.0, %v491
    %493 = vmatprep.mubr.f32.mxu0 0.0
    %494 = vmatmul.mubr.f32.gmra.mrb[0].mxu0 %v295
    %v495 = vpop.f32.mrb[0].mxu0
    %v496 = vadd.f32 0.0, %v495
    %v497 = vpop.f32.mrb[0].mxu0
    %v498 = vadd.f32 0.0, %v497
    %499 = vmatprep.mubr.f32.mxu0 0.0
    %500 = vmatmul.mubr.f32.gmra.mrb[0].mxu0 %v298
    %v501 = vpop.f32.mrb[0].mxu0
    %v502 = vadd.f32 0.0, %v501
    %v503 = vpop.f32.mrb[0].mxu0
    %v504 = vadd.f32 0.0, %v503
    %505 = vmatprep.mubr.f32.mxu0 0.0
    %506 = vmatmul.mubr.f32.gmra.mrb[0].mxu0 %v301
    %v507 = vpop.f32.mrb[0].mxu0
    %v508 = vadd.f32 0.0, %v507
    %v509 = vpop.f32.mrb[0].mxu0
    %v510 = vadd.f32 0.0, %v509
    %511 = vmatprep.mubr.f32.mxu0 0.0
    %512 = vmatmul.mubr.f32.gmra.mrb[0].mxu0 %v304
    %v513 = vpop.f32.mrb[0].mxu0
    %v514 = vadd.f32 0.0, %v513
    %v515 = vpop.f32.mrb[0].mxu0
    %v516 = vadd.f32 0.0, %v515
    %517 = vmatprep.mubr.f32.mxu0 0.0
    %518 = vmatmul.mubr.f32.gmra.mrb[0].mxu0 %v307
    %v519 = vpop.f32.mrb[0].mxu0
    %v520 = vadd.f32 0.0, %v519
    %v521 = vpop.f32.mrb[0].mxu0
    %v522 = vadd.f32 0.0, %v521
    %523 = vmatprep.mubr.f32.mxu0 0.0
    %524 = vmatmul.mubr.f32.gmra.mrb[0].mxu0 %v310
    %v525 = vpop.f32.mrb[0].mxu0
    %v526 = vadd.f32 0.0, %v525
    %v527 = vpop.f32.mrb[0].mxu0
    %v528 = vadd.f32 0.0, %v527
    %529 = vmatprep.mubr.f32.mxu0 0.0
    %530 = vmatmul.mubr.f32.gmra.mrb[0].mxu0 %v313
    %v531 = vpop.f32.mrb[0].mxu0
    %v532 = vadd.f32 0.0, %v531
    %v533 = vpop.f32.mrb[0].mxu0
    %v534 = vadd.f32 0.0, %v533
    %535 = vmatprep.mubr.f32.mxu0 0.0
    %536 = vmatmul.mubr.f32.gmra.mrb[0].mxu0 %v316
    %v537 = vpop.f32.mrb[0].mxu0
    %v538 = vadd.f32 0.0, %v537
    %v539 = vpop.f32.mrb[0].mxu0
    %v540 = vadd.f32 0.0, %v539
    %541 = vmatprep.mubr.f32.mxu0 0.0
    %542 = vmatmul.mubr.f32.gmra.mrb[0].mxu0 %v319
    %v543 = vpop.f32.mrb[0].mxu0
    %v544 = vadd.f32 0.0, %v543
    %v545 = vpop.f32.mrb[0].mxu0
    %v546 = vadd.f32 0.0, %v545
    %547 = vmatprep.mubr.f32.mxu0 0.0
    %548 = vmatmul.mubr.f32.gmra.mrb[0].mxu0 %v322
    %v549 = vpop.f32.mrb[0].mxu0
    %v550 = vadd.f32 0.0, %v549
    %v551 = vpop.f32.mrb[0].mxu0
    %v552 = vadd.f32 0.0, %v551
    %553 = vmatprep.mubr.f32.mxu0 0.0
    %554 = vmatmul.mubr.f32.gmra.mrb[0].mxu0 %v325
    %v555 = vpop.f32.mrb[0].mxu0
    %v556 = vadd.f32 0.0, %v555
    %v557 = vpop.f32.mrb[0].mxu0
    %v558 = vadd.f32 0.0, %v557
    %559 = vmatprep.mubr.f32.mxu0 0.0
    %560 = vmatmul.mubr.f32.gmra.mrb[0].mxu0 %v328
    %v561 = vpop.f32.mrb[0].mxu0
    %v562 = vadd.f32 0.0, %v561
    %v563 = vpop.f32.mrb[0].mxu0
    %v564 = vadd.f32 0.0, %v563
    %565 = vmatprep.mubr.f32.mxu0 0.0
    %566 = vmatmul.mubr.f32.gmra.mrb[0].mxu0 %v331
    %v567 = vpop.f32.mrb[0].mxu0
    %v568 = vadd.f32 0.0, %v567
    %v569 = vpop.f32.mrb[0].mxu0
    %v570 = vadd.f32 0.0, %v569
    %571 = vmatprep.mubr.f32.mxu0 0.0
    %572 = vmatmul.mubr.f32.gmra.mrb[0].mxu0 %v334
    %v573 = vpop.f32.mrb[0].mxu0
    %v574 = vadd.f32 0.0, %v573
    %v575 = vpop.f32.mrb[0].mxu0
    %v576 = vadd.f32 0.0, %v575
    %577 = vmatprep.mubr.f32.mxu0 0.0
    %578 = vmatmul.mubr.f32.gmra.mrb[0].mxu0 %v337
    %v579 = vpop.f32.mrb[0].mxu0
    %v580 = vadd.f32 0.0, %v579
    %v581 = vpop.f32.mrb[0].mxu0
    %v582 = vadd.f32 0.0, %v581
    %583 = vmatprep.mubr.f32.mxu0 0.0
    %584 = vmatmul.mubr.f32.gmra.mrb[0].mxu0 %v340
    %v585 = vpop.f32.mrb[0].mxu0
    %v586 = vadd.f32 0.0, %v585
    %v587 = vpop.f32.mrb[0].mxu0
    %v588 = vadd.f32 0.0, %v587
    %589 = vmatprep.mubr.f32.mxu0 0.0
    %590 = vmatmul.mubr.f32.gmra.mrb[0].mxu0 %v343
    %v591 = vpop.f32.mrb[0].mxu0
    %v592 = vadd.f32 0.0, %v591
    %v593 = vpop.f32.mrb[0].mxu0
    %v594 = vadd.f32 0.0, %v593
    %595 = vmatprep.mubr.f32.mxu0 0.0
    %596 = vmatmul.mubr.f32.gmra.mrb[0].mxu0 %v346
    %v597 = vpop.f32.mrb[0].mxu0
    %v598 = vadd.f32 0.0, %v597
    %v599 = vpop.f32.mrb[0].mxu0
    %v600 = vadd.f32 0.0, %v599
    %601 = vmatprep.mubr.f32.mxu0 0.0
    %602 = vmatmul.mubr.f32.gmra.mrb[0].mxu0 %v349
    %v603 = vpop.f32.mrb[0].mxu0
    %v604 = vadd.f32 0.0, %v603
    %v605 = vpop.f32.mrb[0].mxu0
    %v606 = vadd.f32 0.0, %v605
    %607 = vdwg.mxu0
    %608 = vst [vmem:[#allocation2] sm:$0xff] %v418
    %609 = vst [vmem:[#allocation2 + $0x8] sm:$0xff] %v420
    %610 = vst [vmem:[#allocation2 + $0x10] sm:$0xff] %v424
    %611 = vst [vmem:[#allocation2 + $0x18] sm:$0xff] %v426
    %612 = vst [vmem:[#allocation2 + $0x20] sm:$0xff] %v430
    %613 = vst [vmem:[#allocation2 + $0x28] sm:$0xff] %v432
    %614 = vst [vmem:[#allocation2 + $0x30] sm:$0xff] %v436
    %615 = vst [vmem:[#allocation2 + $0x38] sm:$0xff] %v438
    %616 = vst [vmem:[#allocation2 + $0x40] sm:$0xff] %v442
    %617 = vst [vmem:[#allocation2 + $0x48] sm:$0xff] %v444
    %618 = vst [vmem:[#allocation2 + $0x50] sm:$0xff] %v448
    %619 = vst [vmem:[#allocation2 + $0x58] sm:$0xff] %v450
    %620 = vst [vmem:[#allocation2 + $0x60] sm:$0xff] %v454
    %621 = vst [vmem:[#allocation2 + $0x68] sm:$0xff] %v456
    %622 = vst [vmem:[#allocation2 + $0x70] sm:$0xff] %v460
    %623 = vst [vmem:[#allocation2 + $0x78] sm:$0xff] %v462
    %624 = vst [vmem:[#allocation2 + $0x80] sm:$0xff] %v466
    %625 = vst [vmem:[#allocation2 + $0x88] sm:$0xff] %v468
    %626 = vst [vmem:[#allocation2 + $0x90] sm:$0xff] %v472
    %627 = vst [vmem:[#allocation2 + $0x98] sm:$0xff] %v474
    %628 = vst [vmem:[#allocation2 + $0xa0] sm:$0xff] %v478
    %629 = vst [vmem:[#allocation2 + $0xa8] sm:$0xff] %v480
    %630 = vst [vmem:[#allocation2 + $0xb0] sm:$0xff] %v484
    %631 = vst [vmem:[#allocation2 + $0xb8] sm:$0xff] %v486
    %632 = vst [vmem:[#allocation2 + $0xc0] sm:$0xff] %v490
    %633 = vst [vmem:[#allocation2 + $0xc8] sm:$0xff] %v492
    %634 = vst [vmem:[#allocation2 + $0xd0] sm:$0xff] %v496
    %635 = vst [vmem:[#allocation2 + $0xd8] sm:$0xff] %v498
    %636 = vst [vmem:[#allocation2 + $0xe0] sm:$0xff] %v502
    %637 = vst [vmem:[#allocation2 + $0xe8] sm:$0xff] %v504
    %638 = vst [vmem:[#allocation2 + $0xf0] sm:$0xff] %v508
    %639 = vst [vmem:[#allocation2 + $0xf8] sm:$0xff] %v510
    %640 = vst [vmem:[#allocation2 + $0x100] sm:$0xff] %v514
    %641 = vst [vmem:[#allocation2 + $0x108] sm:$0xff] %v516
    %642 = vst [vmem:[#allocation2 + $0x110] sm:$0xff] %v520
    %643 = vst [vmem:[#allocation2 + $0x118] sm:$0xff] %v522
    %644 = vst [vmem:[#allocation2 + $0x120] sm:$0xff] %v526
    %645 = vst [vmem:[#allocation2 + $0x128] sm:$0xff] %v528
    %646 = vst [vmem:[#allocation2 + $0x130] sm:$0xff] %v532
    %647 = vst [vmem:[#allocation2 + $0x138] sm:$0xff] %v534
    %648 = vst [vmem:[#allocation2 + $0x140] sm:$0xff] %v538
    %649 = vst [vmem:[#allocation2 + $0x148] sm:$0xff] %v540
    %650 = vst [vmem:[#allocation2 + $0x150] sm:$0xff] %v544
    %651 = vst [vmem:[#allocation2 + $0x158] sm:$0xff] %v546
    %652 = vst [vmem:[#allocation2 + $0x160] sm:$0xff] %v550
    %653 = vst [vmem:[#allocation2 + $0x168] sm:$0xff] %v552
    %654 = vst [vmem:[#allocation2 + $0x170] sm:$0xff] %v556
    %655 = vst [vmem:[#allocation2 + $0x178] sm:$0xff] %v558
    %656 = vst [vmem:[#allocation2 + $0x180] sm:$0xff] %v562
    %657 = vst [vmem:[#allocation2 + $0x188] sm:$0xff] %v564
    %658 = vst [vmem:[#allocation2 + $0x190] sm:$0xff] %v568
    %659 = vst [vmem:[#allocation2 + $0x198] sm:$0xff] %v570
    %660 = vst [vmem:[#allocation2 + $0x1a0] sm:$0xff] %v574
    %661 = vst [vmem:[#allocation2 + $0x1a8] sm:$0xff] %v576
    %662 = vst [vmem:[#allocation2 + $0x1b0] sm:$0xff] %v580
    %663 = vst [vmem:[#allocation2 + $0x1b8] sm:$0xff] %v582
    %664 = vst [vmem:[#allocation2 + $0x1c0] sm:$0xff] %v586
    %665 = vst [vmem:[#allocation2 + $0x1c8] sm:$0xff] %v588
    %666 = vst [vmem:[#allocation2 + $0x1d0] sm:$0xff] %v592
    %667 = vst [vmem:[#allocation2 + $0x1d8] sm:$0xff] %v594
    %668 = vst [vmem:[#allocation2 + $0x1e0] sm:$0xff] %v598
    %669 = vst [vmem:[#allocation2 + $0x1e8] sm:$0xff] %v600
    %670 = vst [vmem:[#allocation2 + $0x1f0] sm:$0xff] %v604
    %671 = vst [vmem:[#allocation2 + $0x1f8] sm:$0xff] %v606
    // Predicated region
    $region10: #{tpu_custom_call.1} parent=1 // pred_check
      _
    $region11: #{tpu_custom_call.1} parent=1 // pred_check_branch
      %673 = sbr.rel (0) target = $region13
    $region12: #{tpu_custom_call.1} parent=1 // pred_region
      %s675 = ssub.s32 8192, 8192
      %676 = vsyncadd [#allocation3], %s675
      %s677 = sshll.u32 [#allocation2], 4
      %s678 = int_to_ptr.vmem [resolvable:$true] %s677
      %683 = dma.vmem_to_hbm [thread:$0]  %s678, 8192, %s2, [#allocation3], 256, 256, 16
    $region13: #{tpu_custom_call.1} parent=1 // pred_fallthru
      _
    // Predicated region
    $region14: #{tpu_custom_call.1} parent=1 // pred_check
      _
    $region15: #{tpu_custom_call.1} parent=1 // pred_check_branch
      %685 = sbr.rel (0) target = $region17
    $region16: #{tpu_custom_call.1} parent=1 // pred_region
      %686 = dma.done [#allocation3], 8192
    $region17: #{tpu_custom_call.1} parent=1 // pred_fallthru
      _
    %687 = vsyncpa [#allocation3], 1

</llo_original>
